<compile_context>
chip_gen: v7x
topology: tpu7x:2x2x1
jax: 0.10.0
libtpu: 0.0.40
codegen_flags: <defaults>
</compile_context>

<pallas_src>
import functools

import jax
import jax.numpy as jnp
from jax import lax
from jax.experimental import pallas as pl
from jax.experimental.pallas import tpu as pltpu


def _round_up(x, m):
    return ((x + m - 1) // m) * m


# ----------------------------------------------------------------------------
# Fused MDN head kernel:
#   one MXU matmul -> [mu | sigma=exp(logsigma)] slab + log_softmax(pi) slab
# ----------------------------------------------------------------------------
def _mdn_kernel(x_ref, w_ref, b_ref, musig_ref, logpi_ref, *,
                gl, n_ms, n_gaussians):
    # In-kernel bf16 cast (VPU, hidden under the matmul); accumulate in f32.
    x = x_ref[...].astype(jnp.bfloat16)
    acc = jnp.dot(x, w_ref[...], preferred_element_type=jnp.float32)
    acc = acc + b_ref[...]                                 # (tm, ntot) f32

    # --- mu/logsigma segment: lanes [0,gl) = mu, [gl,2gl) = logsigma ---------
    ms = acc[:, :n_ms]                                     # 128-aligned slice
    lane = lax.broadcasted_iota(jnp.int32, ms.shape, 1)
    is_sigma = jnp.logical_and(lane >= gl, lane < 2 * gl)
    # exp rides the EUP slot; the masked select keeps mu lanes untouched.
    musig_ref[...] = jnp.where(is_sigma, jnp.exp(ms), ms)

    # --- pi segment: masked log_softmax over the first n_gaussians lanes -----
    logits = acc[:, n_ms:]                                 # 128-aligned slice
    lane_p = lax.broadcasted_iota(jnp.int32, logits.shape, 1)
    valid = lane_p < n_gaussians
    masked = jnp.where(valid, logits, -1e30)
    m = jnp.max(masked, axis=-1, keepdims=True)
    ex = jnp.where(valid, jnp.exp(masked - m), 0.0)
    lse = m + jnp.log(jnp.sum(ex, axis=-1, keepdims=True))
    # NOTE: padded lanes (>= n_gaussians) hold garbage (-lse); they are sliced
    # off in the wrapper and must never be read downstream from the raw slab.
    logpi_ref[...] = logits - lse


# ----------------------------------------------------------------------------
# Parameter construction / one-time packing
# ----------------------------------------------------------------------------
def init_mdn_params(key, in_size, latents, n_gaussians):
    """Synthetic init mirroring nn.Linear defaults; weights stored (in, out)."""
    ks = jax.random.split(key, 6)
    k = 1.0 / jnp.sqrt(jnp.float32(in_size))
    gl = latents * n_gaussians
    return {
        "fc_mu_w": jax.random.uniform(ks[0], (in_size, gl), jnp.float32, -k, k),
        "fc_mu_b": jax.random.uniform(ks[1], (gl,), jnp.float32, -k, k),
        "fc_logsigma_w": jax.random.uniform(ks[2], (in_size, gl), jnp.float32, -k, k),
        "fc_logsigma_b": jax.random.uniform(ks[3], (gl,), jnp.float32, -k, k),
        "fc_logpi_w": jax.random.uniform(ks[4], (in_size, n_gaussians), jnp.float32, -k, k),
        "fc_logpi_b": jax.random.uniform(ks[5], (n_gaussians,), jnp.float32, -k, k),
    }


def pack_mdn_params(params, in_size, latents, n_gaussians):
    """Fuse + lane-pad the three heads into one bf16 weight / f32 bias (once).

    Column layout (K = in_size, no K padding):
        [0,        gl)     : fc_mu
        [gl,      2gl)     : fc_logsigma
        [2gl,    n_ms)     : zero pad to a 128-lane boundary
        [n_ms, n_ms+n_pi)  : fc_logpi in the first n_gaussians lanes, rest pad
    """
    gl = latents * n_gaussians
    n_ms = _round_up(2 * gl, 128)          # shared mu + logsigma segment
    n_pi = _round_up(n_gaussians, 128)
    ntot = n_ms + n_pi

    w = jnp.zeros((in_size, ntot), jnp.float32)
    w = w.at[:, 0:gl].set(params["fc_mu_w"])
    w = w.at[:, gl:2 * gl].set(params["fc_logsigma_w"])
    w = w.at[:, n_ms:n_ms + n_gaussians].set(params["fc_logpi_w"])

    b = jnp.zeros((1, ntot), jnp.float32)
    b = b.at[0, 0:gl].set(params["fc_mu_b"])
    b = b.at[0, gl:2 * gl].set(params["fc_logsigma_b"])
    b = b.at[0, n_ms:n_ms + n_gaussians].set(params["fc_logpi_b"])

    # TODO(synk): if sigma feeds a sensitive NLL, consider an f32 (3-pass MXU)
    # path for the logsigma columns instead of the bf16 cast below.
    return {"w": w.astype(jnp.bfloat16), "b": b,
            "gl": gl, "n_ms": n_ms, "n_pi": n_pi, "ntot": ntot}


# ----------------------------------------------------------------------------
# Forward: x (B, in_size) -> (mu (B,G,L), sigma (B,G,L), logpi (B,G))
# ----------------------------------------------------------------------------
_TARGET_TILE_M = 256   # fills the 256-wide MXU M dim on v6e/v7x; fine on v5e.


def mdn_forward(x, packed, latents, n_gaussians):
    B, in_size = x.shape
    gl, n_ms, n_pi, ntot = packed["gl"], packed["n_ms"], packed["n_pi"], packed["ntot"]

    if B <= _TARGET_TILE_M:
        tile_m, grid_m = B, 1              # full-array M block: always legal
    else:
        tile_m, grid_m = _TARGET_TILE_M, pl.cdiv(B, _TARGET_TILE_M)

    # VMEM budget: double-buffered x/output tiles + single-buffered weight/bias.
    x_bytes = x.dtype.itemsize
    vmem_bytes = (2 * tile_m * in_size * x_bytes
                  + in_size * ntot * 2 + ntot * 4
                  + 2 * tile_m * ntot * 4)
    vmem_limit = int(min(64 << 20, max(16 << 20, 2 * vmem_bytes)))

    cost = pl.CostEstimate(
        flops=2 * B * in_size * ntot,
        transcendentals=B * (n_ms + 2 * n_pi),
        bytes_accessed=(B * in_size * x_bytes + in_size * ntot * 2 + ntot * 4
                        + B * ntot * 4),
    )

    kernel = functools.partial(_mdn_kernel, gl=gl, n_ms=n_ms,
                               n_gaussians=n_gaussians)
    musig, logpi_p = pl.pallas_call(
        kernel,
        out_shape=(
            jax.ShapeDtypeStruct((B, n_ms), jnp.float32),
            jax.ShapeDtypeStruct((B, n_pi), jnp.float32),
        ),
        grid=(grid_m,),
        in_specs=[
            # Activations: no host-side padding/cast, tiled over the batch.
            pl.BlockSpec((tile_m, in_size), lambda i: (i, 0)),
            # Fused weight / bias: constant across the grid -> single buffer.
            pl.BlockSpec((in_size, ntot), lambda i: (0, 0),
                         pipeline_mode=pl.Buffered(1)),
            pl.BlockSpec((1, ntot), lambda i: (0, 0),
                         pipeline_mode=pl.Buffered(1)),
        ],
        out_specs=(
            pl.BlockSpec((tile_m, n_ms), lambda i: (i, 0)),
            pl.BlockSpec((tile_m, n_pi), lambda i: (i, 0)),
        ),
        compiler_params=pltpu.CompilerParams(
            dimension_semantics=("parallel",),     # megacore sharding on v7x
            vmem_limit_bytes=vmem_limit,
        ),
        cost_estimate=cost,
    )(x, packed["w"], packed["b"])

    # TODO(synk): keep the padded (B, 128k) slabs as the interchange format (or
    # fuse the MDN NLL into this kernel) to drop these slice/reshape copies.
    mu = musig[:, :gl].reshape(B, n_gaussians, latents)
    sigma = musig[:, gl:2 * gl].reshape(B, n_gaussians, latents)
    logpi = logpi_p[:, :n_gaussians]
    return mu, sigma, logpi


def _reference_forward(x, params, latents, n_gaussians):
    B = x.shape[0]
    mu = (x @ params["fc_mu_w"] + params["fc_mu_b"]).reshape(B, n_gaussians, latents)
    logsigma = (x @ params["fc_logsigma_w"] + params["fc_logsigma_b"]).reshape(
        B, n_gaussians, latents)
    logits = x @ params["fc_logpi_w"] + params["fc_logpi_b"]
    return mu, jnp.exp(logsigma), jax.nn.log_softmax(logits, axis=-1)


if __name__ == "__main__":
    key = jax.random.PRNGKey(0)
    k_params, k_input = jax.random.split(key)

    B, IN_SIZE, LATENTS, N_GAUSSIANS = 2, 32, 8, 5

    params = init_mdn_params(k_params, IN_SIZE, LATENTS, N_GAUSSIANS)
    packed = pack_mdn_params(params, IN_SIZE, LATENTS, N_GAUSSIANS)
    x = jax.random.normal(k_input, (B, IN_SIZE), dtype=jnp.float32)

    mu, sigma, logpi = mdn_forward(x, packed, LATENTS, N_GAUSSIANS)
    jax.block_until_ready((mu, sigma, logpi))

    assert mu.shape == (B, N_GAUSSIANS, LATENTS)
    assert sigma.shape == (B, N_GAUSSIANS, LATENTS)
    assert logpi.shape == (B, N_GAUSSIANS)

    # Sanity vs. a pure-JAX f32 reference (bf16 MXU inputs -> loose tolerance).
    mu_r, sigma_r, logpi_r = _reference_forward(x, params, LATENTS, N_GAUSSIANS)
    assert jnp.allclose(mu, mu_r, rtol=5e-2, atol=5e-2)
    assert jnp.allclose(sigma, sigma_r, rtol=5e-2, atol=5e-2)
    assert jnp.allclose(logpi, logpi_r, rtol=5e-2, atol=5e-2)
    assert jnp.allclose(jnp.sum(jnp.exp(logpi), axis=-1), 1.0, atol=1e-3)

    print("KERNEL_OK")
</pallas_src>

<mosaic_0001>
module attributes {stable_mosaic.version = 11 : i64} {
  func.func @_mdn_kernel(%arg0: i32, %arg1: memref<2x32xf32, #tpu.memory_space<vmem>>, %arg2: memref<32x256xbf16, #tpu.memory_space<vmem>>, %arg3: memref<1x256xf32, #tpu.memory_space<vmem>>, %arg4: memref<2x128xf32, #tpu.memory_space<vmem>>, %arg5: memref<2x128xf32, #tpu.memory_space<vmem>>) attributes {dimension_semantics = [#tpu.dimension_semantics<parallel>], iteration_bounds = array<i64: 1>, scalar_prefetch = 0 : i64, scratch_operands = 0 : i64, tpu.core_type = #tpu.core_type<tc>, window_params = [{transform_indices = @transform_0, window_bounds = array<i64: 2, 32>}, {pipeline_mode = #tpu.pipeline_mode<synchronous>, transform_indices = @transform_1, window_bounds = array<i64: 32, 256>}, {pipeline_mode = #tpu.pipeline_mode<synchronous>, transform_indices = @transform_2, window_bounds = array<i64: 1, 256>}, {transform_indices = @transform_3, window_bounds = array<i64: 2, 128>}, {transform_indices = @transform_4, window_bounds = array<i64: 2, 128>}]} {
    %c0 = arith.constant 0 : index
    %c0_0 = arith.constant 0 : index
    %0 = vector.load %arg1[%c0, %c0_0] : memref<2x32xf32, #tpu.memory_space<vmem>>, vector<2x32xf32>
    %1 = arith.truncf %0 : vector<2x32xf32> to vector<2x32xbf16>
    %c0_1 = arith.constant 0 : index
    %c0_2 = arith.constant 0 : index
    %2 = vector.load %arg2[%c0_1, %c0_2] : memref<32x256xbf16, #tpu.memory_space<vmem>>, vector<32x256xbf16>
    %cst = arith.constant dense<0.000000e+00> : vector<2x256xf32>
    %3 = tpu.matmul %1, %2, %cst {dimension_numbers = #tpu.dot_dimension_numbers<[1], [0], [0], [1], [0, 0, 1, 1], [], []>} : vector<2x32xbf16>, vector<32x256xbf16>, vector<2x256xf32> -> vector<2x256xf32>
    %c0_3 = arith.constant 0 : index
    %c0_4 = arith.constant 0 : index
    %4 = vector.load %arg3[%c0_3, %c0_4] : memref<1x256xf32, #tpu.memory_space<vmem>>, vector<1x256xf32>
    %5 = vector.broadcast %4 : vector<1x256xf32> to vector<2x256xf32>
    %6 = arith.addf %3, %5 : vector<2x256xf32>
    %7 = vector.extract_strided_slice %6 {offsets = [0, 0], sizes = [2, 128], strides = [1, 1]} : vector<2x256xf32> to vector<2x128xf32>
    %8 = tpu.iota {dimensions = array<i32: 1>} : vector<2x128xi32>
    %c40_i32 = arith.constant 40 : i32
    %9 = vector.broadcast %c40_i32 : i32 to vector<2x128xi32>
    %10 = arith.cmpi sge, %8, %9 : vector<2x128xi32>
    %c80_i32 = arith.constant 80 : i32
    %11 = vector.broadcast %c80_i32 : i32 to vector<2x128xi32>
    %12 = arith.cmpi slt, %8, %11 : vector<2x128xi32>
    %13 = arith.andi %10, %12 : vector<2x128xi1>
    %14 = math.exp %7 : vector<2x128xf32>
    %15 = arith.select %13, %14, %7 : vector<2x128xi1>, vector<2x128xf32>
    %c0_5 = arith.constant 0 : index
    %c0_6 = arith.constant 0 : index
    %16 = vector.load %arg4[%c0_5, %c0_6] : memref<2x128xf32, #tpu.memory_space<vmem>>, vector<2x128xf32>
    tpu.vector_store %arg4[%c0_5, %c0_6], %15 {strides = array<i32>} : memref<2x128xf32, #tpu.memory_space<vmem>>, vector<2x128xf32>,
    %17 = vector.extract_strided_slice %6 {offsets = [0, 128], sizes = [2, 128], strides = [1, 1]} : vector<2x256xf32> to vector<2x128xf32>
    %18 = tpu.iota {dimensions = array<i32: 1>} : vector<2x128xi32>
    %c5_i32 = arith.constant 5 : i32
    %19 = vector.broadcast %c5_i32 : i32 to vector<2x128xi32>
    %20 = arith.cmpi slt, %18, %19 : vector<2x128xi32>
    %cst_7 = arith.constant -1.000000e+30 : f32
    %21 = vector.broadcast %cst_7 : f32 to vector<2x128xf32>
    %22 = arith.select %20, %17, %21 : vector<2x128xi1>, vector<2x128xf32>
    %cst_8 = arith.constant dense<0xFF800000> : vector<2xf32>
    %23 = vector.multi_reduction <maximumf>, %22, %cst_8 [1] : vector<2x128xf32> to vector<2xf32>
    %24 = vector.shape_cast %23 : vector<2xf32> to vector<2x1xf32>
    %25 = vector.broadcast %24 : vector<2x1xf32> to vector<2x128xf32>
    %26 = arith.subf %22, %25 : vector<2x128xf32>
    %27 = math.exp %26 : vector<2x128xf32>
    %cst_9 = arith.constant 0.000000e+00 : f32
    %28 = vector.broadcast %cst_9 : f32 to vector<2x128xf32>
    %29 = arith.select %20, %27, %28 : vector<2x128xi1>, vector<2x128xf32>
    %cst_10 = arith.constant dense<0.000000e+00> : vector<2xf32>
    %30 = vector.multi_reduction <add>, %29, %cst_10 [1] : vector<2x128xf32> to vector<2xf32>
    %31 = vector.shape_cast %30 : vector<2xf32> to vector<2x1xf32>
    %32 = math.log %31 : vector<2x1xf32>
    %33 = arith.addf %24, %32 : vector<2x1xf32>
    %34 = vector.broadcast %33 : vector<2x1xf32> to vector<2x128xf32>
    %35 = arith.subf %17, %34 : vector<2x128xf32>
    %c0_11 = arith.constant 0 : index
    %c0_12 = arith.constant 0 : index
    %36 = vector.load %arg5[%c0_11, %c0_12] : memref<2x128xf32, #tpu.memory_space<vmem>>, vector<2x128xf32>
    tpu.vector_store %arg5[%c0_11, %c0_12], %35 {strides = array<i32>} : memref<2x128xf32, #tpu.memory_space<vmem>>, vector<2x128xf32>,
    return
  }
  func.func @transform_0(%arg0: i32) -> (i32, i32) {
    %c0_i32 = arith.constant 0 : i32
    %c0_i32_0 = arith.constant 0 : i32
    return %arg0, %c0_i32 : i32, i32
  }
  func.func @transform_1(%arg0: i32) -> (i32, i32) {
    %c0_i32 = arith.constant 0 : i32
    %c0_i32_0 = arith.constant 0 : i32
    %c0_i32_1 = arith.constant 0 : i32
    return %c0_i32, %c0_i32_0 : i32, i32
  }
  func.func @transform_2(%arg0: i32) -> (i32, i32) {
    %c0_i32 = arith.constant 0 : i32
    %c0_i32_0 = arith.constant 0 : i32
    %c0_i32_1 = arith.constant 0 : i32
    return %c0_i32, %c0_i32_0 : i32, i32
  }
  func.func @transform_3(%arg0: i32) -> (i32, i32) {
    %c0_i32 = arith.constant 0 : i32
    %c0_i32_0 = arith.constant 0 : i32
    return %arg0, %c0_i32 : i32, i32
  }
  func.func @transform_4(%arg0: i32) -> (i32, i32) {
    %c0_i32 = arith.constant 0 : i32
    %c0_i32_0 = arith.constant 0 : i32
    return %arg0, %c0_i32 : i32, i32
  }
}

</mosaic_0001>

<llo_original>
// kernel: tpu_custom_call.1
$region0: #{tpu_custom_call.1}
  #allocation0 [shape = 'u32[]', space=smem, size = 0x4, offset = 0x4, fixed_abs, tag = 'smem constant byte address 0x4 - core index']
  #allocation1 [shape = 'u32[144,128]{1,0:T(1,128)}', space=vmem, size = 0x12000, scoped, tag = 'internal scratch']
  %s0 = inlined_call_operand.hbm [shape: f32[2,32], index: 0, kind: input, shape index: {}]
  %s1 = inlined_call_operand.hbm [shape: bf16[32,256], index: 1, kind: input, shape index: {}]
  %s2 = inlined_call_operand.vmem [shape: f32[1,256], index: 2, kind: input, shape index: {}]
  %s3 = inlined_call_operand.hbm [shape: f32[2,128], index: 3, kind: output, shape index: {0}]
  %s4 = inlined_call_operand.hbm [shape: f32[2,128], index: 4, kind: output, shape index: {1}]
  %5 = xla_tuple %s3, %s4
  %s6 = sld [smem:[#allocation0]]
  $region38: #{tpu_custom_call.1} parent=0
    _
  %s8 = ssub.s32 1, %s6
  %s9 = scalar_select 0, %s8, %s6
  $region1: #{tpu_custom_call.1} parent=0
    #allocation2 [shape = 'u8[1024]{0}', space=vmem, size = 0x400, scoped, tag = 'input window, operand 0, single buffered']
    #allocation3 [shape = 's32[1]{0}', space=sflag, size = 0x4, scoped, tag = 'scoped memory for tpu_custom_call.1']
    #allocation4 [shape = 's32[1]{0}', space=sflag, size = 0x4, scoped, tag = 'scoped memory for tpu_custom_call.1']
    #allocation5 [shape = 'u8[16384]{0}', space=vmem, size = 0x4000, scoped, tag = 'input window, operand 1, single buffered']
    #allocation6 [shape = 's32[1]{0}', space=sflag, size = 0x4, scoped, tag = 'scoped memory for tpu_custom_call.1']
    #allocation7 [shape = 'u8[1024]{0}', space=vmem, size = 0x400, scoped, tag = 'output window, operand 0, single buffered']
    #allocation8 [shape = 'u8[1024]{0}', space=vmem, size = 0x400, scoped, tag = 'output window, operand 1, single buffered']
    #allocation9 [shape = 's32[1]{0}', space=sflag, size = 0x4, scoped, tag = 'scoped memory for tpu_custom_call.1']
    %10 = vsyncpa [#allocation3], 0
    %11 = vsyncpa [#allocation6], 0
    %12 = vsyncpa [#allocation4], 0
    %13 = vsyncpa [#allocation9], 0
    // Predicated region
    $region2: #{tpu_custom_call.1} parent=1 // pred_check
      _
    $region3: #{tpu_custom_call.1} parent=1 // pred_check_branch
      %15 = sbr.rel (0) target = $region5
    $region4: #{tpu_custom_call.1} parent=1 // pred_region
      %s17 = ssub.s32 32, 32
      %18 = vsyncadd [#allocation3], %s17
      %s20 = sshll.u32 [#allocation2], 4
      %s21 = int_to_ptr.vmem [resolvable:$true] %s20
      %23 = dma.hbm_to_vmem [thread:$0]  %s0, 32, %s21, [#allocation3]
    $region5: #{tpu_custom_call.1} parent=1 // pred_fallthru
      _
    // Predicated region
    $region6: #{tpu_custom_call.1} parent=1 // pred_check
      _
    $region7: #{tpu_custom_call.1} parent=1 // pred_check_branch
      %25 = sbr.rel (0) target = $region9
    $region8: #{tpu_custom_call.1} parent=1 // pred_region
      %s27 = ssub.s32 512, 512
      %28 = vsyncadd [#allocation6], %s27
      %s29 = sshll.u32 [#allocation5], 4
      %s30 = int_to_ptr.vmem [resolvable:$true] %s29
      %35 = dma.hbm_to_vmem [thread:$0]  %s1, 512, %s30, [#allocation6], 128, 128, 8
    $region9: #{tpu_custom_call.1} parent=1 // pred_fallthru
      _
    // Predicated region
    $region10: #{tpu_custom_call.1} parent=1 // pred_check
      _
    $region11: #{tpu_custom_call.1} parent=1 // pred_check_branch
      %37 = sbr.rel (0) target = $region13
    $region12: #{tpu_custom_call.1} parent=1 // pred_region
      _
    $region13: #{tpu_custom_call.1} parent=1 // pred_fallthru
      _
    // Predicated region
    $region14: #{tpu_custom_call.1} parent=1 // pred_check
      _
    $region15: #{tpu_custom_call.1} parent=1 // pred_check_branch
      %39 = sbr.rel (0) target = $region17
    $region16: #{tpu_custom_call.1} parent=1 // pred_region
      %40 = dma.done [#allocation3], 32
    $region17: #{tpu_custom_call.1} parent=1 // pred_fallthru
      _
    // Predicated region
    $region18: #{tpu_custom_call.1} parent=1 // pred_check
      _
    $region19: #{tpu_custom_call.1} parent=1 // pred_check_branch
      %42 = sbr.rel (0) target = $region21
    $region20: #{tpu_custom_call.1} parent=1 // pred_region
      %43 = dma.done [#allocation6], 512
    $region21: #{tpu_custom_call.1} parent=1 // pred_fallthru
      _
    %v45 = vld [vmem:[#allocation2] sm:$0x3]
    %v46 = vpack.c.bf16 %v45, %v45
    %v47 = vld [vmem:[#allocation5] sm:$0xff]
    %v48 = vld [vmem:[#allocation5 + $0x8] sm:$0xff]
    %v49 = vld [vmem:[#allocation5 + $0x10] sm:$0xff]
    %v50 = vld [vmem:[#allocation5 + $0x18] sm:$0xff]
    %v51 = vld [vmem:[%s2] sm:$0x3]
    %v53 = vlaneseq
    %v54 = vshrl.u32 %v53, 7
    %v55 = vsub.s32 0, %v54
    %v56 = vrot.slane %v51, %v55
    %v57 = vlaneseq
    %v58 = vshrl.u32 %v57, 7
    %v59 = vsub.s32 1, %v58
    %v60 = vrot.slane %v51, %v59
    %v67 = vunpack.c.l.b16 %v47
    %v68 = vunpack.c.h.b16 %v47
    %v69 = vunpack.c.l.b16 %v48
    %v70 = vunpack.c.h.b16 %v48
    %v71 = vunpack.c.l.b16 %v49
    %v72 = vunpack.c.h.b16 %v49
    %v73 = vunpack.c.l.b16 %v50
    %v74 = vunpack.c.h.b16 %v50
    %v75 = vpack.c.b16 %v69, %v67
    %v76 = vpack.c.b16 %v70, %v68
    %v77 = vpack.c.b16 %v73, %v71
    %v78 = vpack.c.b16 %v74, %v72
    %vm83 = vcmask 261120
    %v85 = vsel %vm83, %v46, 0
    %87 = vmatprep.subr.bf16.mxu0 %v76
    %88 = vmatpush1.bf16.msra.mxu0 %v75
    %89 = vmatprep.subr.bf16.mxu0 %v78
    %90 = vmatpush1.bf16.msra.mxu0 %v77
    %91 = vmatprep.subr.bf16.mxu0 0
    %92 = vmatpush1.bf16.msra.mxu0 0
    %93 = vmatprep.subr.bf16.mxu0 0
    %94 = vmatpush1.bf16.msra.mxu0 0
    %95 = vmatprep.subr.bf16.mxu0 0
    %96 = vmatpush1.bf16.msra.mxu0 0
    %97 = vmatprep.subr.bf16.mxu0 0
    %98 = vmatpush1.bf16.msra.mxu0 0
    %99 = vmatprep.subr.bf16.mxu0 0
    %100 = vmatpush1.bf16.msra.mxu0 0
    %101 = vmatprep.subr.bf16.mxu0 0
    %102 = vmatpush1.bf16.msra.mxu0 0
    %103 = vmatprep.subr.bf16.mxu0 0
    %104 = vmatpush1.bf16.msra.mxu0 0
    %105 = vmatprep.subr.bf16.mxu0 0
    %106 = vmatpush1.bf16.msra.mxu0 0
    %107 = vmatprep.subr.bf16.mxu0 0
    %108 = vmatpush1.bf16.msra.mxu0 0
    %109 = vmatprep.subr.bf16.mxu0 0
    %110 = vmatpush1.bf16.msra.mxu0 0
    %111 = vmatprep.subr.bf16.mxu0 0
    %112 = vmatpush1.bf16.msra.mxu0 0
    %113 = vmatprep.subr.bf16.mxu0 0
    %114 = vmatpush1.bf16.msra.mxu0 0
    %115 = vmatprep.subr.bf16.mxu0 0
    %116 = vmatpush1.bf16.msra.mxu0 0
    %117 = vmatprep.subr.bf16.mxu0 0
    %118 = vmatpush1.bf16.msra.mxu0 0
    %119 = vmatprep.mubr.bf16.mxu0 0
    %120 = vmatmul.mubr.bf16.gmra.mrb[0].mxu0 %v85
    %v121 = vpop.f32.mrb[0].mxu0
    %v122 = vadd.f32 %v56, %v121
    %v123 = vpop.f32.mrb[0].mxu0
    %v124 = vadd.f32 %v60, %v123
    %v125 = vpop.f32.mrb[0].mxu0
    %v126 = vpop.f32.mrb[0].mxu0
    %127 = vdwg.mxu0
    %v128 = vlaneseq
    %v129 = vand.u32 %v128, 127
    %vm130 = vcmp.ge.s32.totalorder %v129, 40
    %vm131 = vcmp.lt.s32.totalorder %v129, 80
    %vm132 = vmand %vm130, %vm131
    %v133 = vmul.f32 %v122, 1.442695
    %v134 = vpow.pop %v133
    %v135 = vsel %vm132, %v134, %v122
    %136 = vst [vmem:[#allocation7] sm:$0x3] %v135
    %vm137 = vcmp.lt.s32.totalorder %v129, 5
    %v138 = vsel %vm137, %v124, -1e+30
    %vm139 = vcmask 1041408
    %v140 = vsel %vm139, %v138, -inf
    %141 = vmax.xlane.f32.xlu0 %v140
    %v142 = vpop.xlane.xlu0 %141
    %v143 = vsub.f32 %v138, %v142
    %v144 = vmul.f32 %v143, 1.442695
    %v145 = vpow.pop %v144
    %v146 = vsel %vm137, %v145, 0.0
    %v147 = vsel %vm139, %v146, 0.0
    %148 = vadd.xlane.f32.xlu0 %v147
    %v149 = vpop.xlane.xlu0 %148
    %v150 = vlog2.pop %v149
    %v151 = vmul.f32 %v150, 0.6931472
    %v152 = vadd.f32 %v142, %v151
    %v153 = vsub.f32 %v124, %v152
    %154 = vst [vmem:[#allocation8] sm:$0x3] %v153
    // Predicated region
    $region22: #{tpu_custom_call.1} parent=1 // pred_check
      _
    $region23: #{tpu_custom_call.1} parent=1 // pred_check_branch
      %156 = sbr.rel (0) target = $region25
    $region24: #{tpu_custom_call.1} parent=1 // pred_region
      %s158 = ssub.s32 32, 32
      %159 = vsyncadd [#allocation4], %s158
      %s161 = sshll.u32 [#allocation7], 4
      %s162 = int_to_ptr.vmem [resolvable:$true] %s161
      %164 = dma.vmem_to_hbm [thread:$0]  %s162, 32, %s3, [#allocation4]
    $region25: #{tpu_custom_call.1} parent=1 // pred_fallthru
      _
    // Predicated region
    $region26: #{tpu_custom_call.1} parent=1 // pred_check
      _
    $region27: #{tpu_custom_call.1} parent=1 // pred_check_branch
      %166 = sbr.rel (0) target = $region29
    $region28: #{tpu_custom_call.1} parent=1 // pred_region
      %s168 = ssub.s32 32, 32
      %169 = vsyncadd [#allocation9], %s168
      %s171 = sshll.u32 [#allocation8], 4
      %s172 = int_to_ptr.vmem [resolvable:$true] %s171
      %174 = dma.vmem_to_hbm [thread:$0]  %s172, 32, %s4, [#allocation9]
    $region29: #{tpu_custom_call.1} parent=1 // pred_fallthru
      _
    // Predicated region
    $region30: #{tpu_custom_call.1} parent=1 // pred_check
      _
    $region31: #{tpu_custom_call.1} parent=1 // pred_check_branch
      %176 = sbr.rel (0) target = $region33
    $region32: #{tpu_custom_call.1} parent=1 // pred_region
      %177 = dma.done [#allocation4], 32
    $region33: #{tpu_custom_call.1} parent=1 // pred_fallthru
      _
    // Predicated region
    $region34: #{tpu_custom_call.1} parent=1 // pred_check
      _
    $region35: #{tpu_custom_call.1} parent=1 // pred_check_branch
      %179 = sbr.rel (0) target = $region37
    $region36: #{tpu_custom_call.1} parent=1 // pred_region
      %180 = dma.done [#allocation9], 32
    $region37: #{tpu_custom_call.1} parent=1 // pred_fallthru
      _
    %181 = vsyncpa [#allocation3], 1
    %182 = vsyncpa [#allocation6], 1
    %183 = vsyncpa [#allocation4], 1
    %184 = vsyncpa [#allocation9], 1

</llo_original>
